<compile_context>
chip_gen: v7x
topology: tpu7x:2x2x1
jax: 0.10.0
libtpu: 0.0.40
codegen_flags: <defaults>
</compile_context>

<pallas_src>
import jax
import jax.numpy as jnp
from jax.experimental import pallas as pl
from jax.experimental.pallas import tpu as pltpu


def _copy_kernel(w_ref, o_ref):
    # forward(): return self.weight  (pure copy of the current tile).
    o_ref[...] = w_ref[...]


def _lane_dense_factorization(total, max_cols=2048):
    """Pick the largest last-dim that is a multiple of 128 and divides total."""
    for cols in range(max_cols, 127, -128):
        if total % cols == 0:
            return total // cols, cols
    return None


def synthesized_image_forward(weight: jax.Array) -> jax.Array:
    """Pallas equivalent of SynthesizedImage.forward() (materialized copy)."""
    shape = weight.shape
    total = 1
    for d in shape:
        total *= d
    itemsize = jnp.dtype(weight.dtype).itemsize

    fact = _lane_dense_factorization(total)
    if fact is None:
        # Element count not a multiple of 128: single whole-array block in VMEM
        # (block == full dims satisfies the (8,128) rule for any shape).
        return pl.pallas_call(
            _copy_kernel,
            out_shape=jax.ShapeDtypeStruct(shape, weight.dtype),
        )(weight)

    rows, cols = fact
    w2d = weight.reshape(rows, cols)  # free layout plumbing in the wrapper

    # ~2 MiB per block => (in + out) x 2 double buffers ~= 8 MiB of VMEM,
    # comfortably inside v5e's 16 MiB / v6e's 32 MiB / v7x's 32 MiB default
    # scoped VMEM.  Block rows kept a multiple of 8 (sublane granularity).
    max_block_bytes = 2 * 1024 * 1024
    max_block_rows = max(8, ((max_block_bytes // (cols * itemsize)) // 8) * 8)
    block_rows = min(rows, max_block_rows)

    grid_rows = pl.cdiv(rows, block_rows)
    if grid_rows == 1:
        block_rows = rows  # one full block: no masked stores, no pipeline overhead

    out2d = pl.pallas_call(
        _copy_kernel,
        out_shape=jax.ShapeDtypeStruct((rows, cols), weight.dtype),
        grid=(grid_rows,),
        in_specs=[pl.BlockSpec((block_rows, cols), lambda i: (i, 0))],
        out_specs=pl.BlockSpec((block_rows, cols), lambda i: (i, 0)),
        compiler_params=pltpu.CompilerParams(
            dimension_semantics=("parallel",),
        ),
    )(w2d)
    return out2d.reshape(shape)


class SynthesizedImage:
    """Minimal JAX-side mirror of the PyTorch module."""

    def __init__(self, img_shape, key):
        # nn.Parameter(torch.rand(*img_shape)) -> uniform [0, 1), float32.
        self.weight = jax.random.uniform(
            key, shape=tuple(img_shape), dtype=jnp.float32
        )

    def forward(self, materialize: bool = True):
        if not materialize:
            # True-to-spec fastest path: PyTorch forward() returns the
            # parameter itself — no copy, no HBM traffic.
            return self.weight
        return synthesized_image_forward(self.weight)

    __call__ = forward


if __name__ == "__main__":
    key = jax.random.PRNGKey(0)
    # Small image shape consistent with the style-transfer usage: (N, C, H, W)
    img_shape = (1, 3, 16, 16)
    model = SynthesizedImage(img_shape, key)

    # Zero-cost path (exact module semantics): returns the parameter itself.
    direct = model(materialize=False)
    assert direct is model.weight

    # Pallas materialized path: single lane-dense (1, 768) block, one grid step.
    out = jax.block_until_ready(model())
    assert out.shape == img_shape
    assert out.dtype == jnp.float32
    assert jnp.allclose(out, model.weight)

    print("KERNEL_OK")
</pallas_src>

<mosaic_0001>
module attributes {stable_mosaic.version = 11 : i64} {
  func.func @_copy_kernel(%arg0: i32, %arg1: memref<1x768xf32, #tpu.memory_space<vmem>>, %arg2: memref<1x768xf32, #tpu.memory_space<vmem>>) attributes {dimension_semantics = [#tpu.dimension_semantics<parallel>], iteration_bounds = array<i64: 1>, scalar_prefetch = 0 : i64, scratch_operands = 0 : i64, tpu.core_type = #tpu.core_type<tc>, window_params = [{transform_indices = @transform_0, window_bounds = array<i64: 1, 768>}, {transform_indices = @transform_1, window_bounds = array<i64: 1, 768>}]} {
    %c0 = arith.constant 0 : index
    %c0_0 = arith.constant 0 : index
    %0 = vector.load %arg1[%c0, %c0_0] : memref<1x768xf32, #tpu.memory_space<vmem>>, vector<1x768xf32>
    %c0_1 = arith.constant 0 : index
    %c0_2 = arith.constant 0 : index
    %1 = vector.load %arg2[%c0_1, %c0_2] : memref<1x768xf32, #tpu.memory_space<vmem>>, vector<1x768xf32>
    tpu.vector_store %arg2[%c0_1, %c0_2], %0 {strides = array<i32>} : memref<1x768xf32, #tpu.memory_space<vmem>>, vector<1x768xf32>,
    return
  }
  func.func @transform_0(%arg0: i32) -> (i32, i32) {
    %c0_i32 = arith.constant 0 : i32
    %c0_i32_0 = arith.constant 0 : i32
    return %arg0, %c0_i32 : i32, i32
  }
  func.func @transform_1(%arg0: i32) -> (i32, i32) {
    %c0_i32 = arith.constant 0 : i32
    %c0_i32_0 = arith.constant 0 : i32
    return %arg0, %c0_i32 : i32, i32
  }
}

</mosaic_0001>

<llo_original>
// kernel: tpu_custom_call.1
$region0: #{tpu_custom_call.1}
  #allocation0 [shape = 'u32[]', space=smem, size = 0x4, offset = 0x4, fixed_abs, tag = 'smem constant byte address 0x4 - core index']
  #allocation1 [shape = 'u32[144,128]{1,0:T(1,128)}', space=vmem, size = 0x12000, scoped, tag = 'internal scratch']
  %s0 = inlined_call_operand.hbm [shape: f32[1,768], index: 0, kind: input, shape index: {}]
  %s1 = inlined_call_operand.hbm [shape: f32[1,768], index: 1, kind: output, shape index: {}]
  %s2 = sld [smem:[#allocation0]]
  $region18: #{tpu_custom_call.1} parent=0
    _
  %s4 = ssub.s32 1, %s2
  %s5 = scalar_select 0, %s4, %s2
  $region1: #{tpu_custom_call.1} parent=0
    #allocation2 [shape = 'u8[3072]{0}', space=vmem, size = 0xc00, scoped, tag = 'input window, operand 0, single buffered']
    #allocation3 [shape = 's32[1]{0}', space=sflag, size = 0x4, scoped, tag = 'scoped memory for tpu_custom_call.1']
    #allocation4 [shape = 's32[1]{0}', space=sflag, size = 0x4, scoped, tag = 'scoped memory for tpu_custom_call.1']
    #allocation5 [shape = 'u8[3072]{0}', space=vmem, size = 0xc00, scoped, tag = 'output window, operand 0, single buffered']
    %6 = vsyncpa [#allocation3], 0
    %7 = vsyncpa [#allocation4], 0
    // Predicated region
    $region2: #{tpu_custom_call.1} parent=1 // pred_check
      _
    $region3: #{tpu_custom_call.1} parent=1 // pred_check_branch
      %9 = sbr.rel (0) target = $region5
    $region4: #{tpu_custom_call.1} parent=1 // pred_region
      %s11 = ssub.s32 96, 96
      %12 = vsyncadd [#allocation3], %s11
      %s14 = sshll.u32 [#allocation2], 4
      %s15 = int_to_ptr.vmem [resolvable:$true] %s14
      %17 = dma.hbm_to_vmem [thread:$0]  %s0, 96, %s15, [#allocation3]
    $region5: #{tpu_custom_call.1} parent=1 // pred_fallthru
      _
    // Predicated region
    $region6: #{tpu_custom_call.1} parent=1 // pred_check
      _
    $region7: #{tpu_custom_call.1} parent=1 // pred_check_branch
      %19 = sbr.rel (0) target = $region9
    $region8: #{tpu_custom_call.1} parent=1 // pred_region
      %20 = dma.done [#allocation3], 96
    $region9: #{tpu_custom_call.1} parent=1 // pred_fallthru
      _
    %v21 = vld [vmem:[#allocation2] sm:$0x3f]
    %v22 = vlaneseq
    %vm23 = vcmp.ge.s32.totalorder %v22, 0
    %vm24 = vcmp.lt.s32.totalorder %v22, 768
    %vm25 = vmand %vm23, %vm24
    %26 = vst.msk [vmem:[#allocation5] sm:$0x3f] %vm25, %v21
    // Predicated region
    $region10: #{tpu_custom_call.1} parent=1 // pred_check
      _
    $region11: #{tpu_custom_call.1} parent=1 // pred_check_branch
      %28 = sbr.rel (0) target = $region13
    $region12: #{tpu_custom_call.1} parent=1 // pred_region
      %s30 = ssub.s32 96, 96
      %31 = vsyncadd [#allocation4], %s30
      %s33 = sshll.u32 [#allocation5], 4
      %s34 = int_to_ptr.vmem [resolvable:$true] %s33
      %36 = dma.vmem_to_hbm [thread:$0]  %s34, 96, %s1, [#allocation4]
    $region13: #{tpu_custom_call.1} parent=1 // pred_fallthru
      _
    // Predicated region
    $region14: #{tpu_custom_call.1} parent=1 // pred_check
      _
    $region15: #{tpu_custom_call.1} parent=1 // pred_check_branch
      %38 = sbr.rel (0) target = $region17
    $region16: #{tpu_custom_call.1} parent=1 // pred_region
      %39 = dma.done [#allocation4], 96
    $region17: #{tpu_custom_call.1} parent=1 // pred_fallthru
      _
    %40 = vsyncpa [#allocation3], 1
    %41 = vsyncpa [#allocation4], 1

</llo_original>
